<compile_context>
chip_gen: v5e
topology: v5e:2x2
jax: 0.10.0
libtpu: 0.0.40
codegen_flags: <defaults>
</compile_context>

<pallas_src>
import functools

import jax
import jax.numpy as jnp
from jax import lax
from jax.experimental import pallas as pl
from jax.experimental.pallas import tpu as pltpu


def _round_up(n: int, m: int) -> int:
    return ((n + m - 1) // m) * m


def mlp_chain_kernel(x_ref, w_ref, b_ref, o_ref, *, compute_dtype):
    """Chain of L affine layers, activation carried entirely in registers.

    x_ref: (TM, Dp)      input batch tile
    w_ref: (L, Dp, Dp)   pre-transposed, padded weights (compute_dtype)
    b_ref: (L, 1, Dp)    padded biases (f32)
    o_ref: (TM, Dp)      output batch tile
    """
    L = w_ref.shape[0]
    acc0 = x_ref[...].astype(jnp.float32)

    def body(l, acc):
        # MXU operands in compute_dtype (bf16 on v6e/v7x), f32 accumulation.
        y = jnp.dot(acc.astype(compute_dtype), w_ref[l],
                    preferred_element_type=jnp.float32)
        # (1, Dp) bias row-broadcasts in the f32 add; no explicit tile broadcast.
        return y + b_ref[l]

    # Static trip count (10), fully unrolled for LLO scheduler visibility.
    acc = lax.fori_loop(0, L, body, acc0, unroll=True)
    o_ref[...] = acc.astype(o_ref.dtype)


def some_module_forward(x, w_stacked, b_stacked, *,
                        compute_dtype=jnp.float32, tm=None):
    """x: (B, D), w_stacked: (L, D, D) pre-transposed, b_stacked: (L, 1, D) -> (B, D).

    Use compute_dtype=jnp.bfloat16 on v6e/v7x for the fast MXU path (f32 accumulate).
    """
    B, D = x.shape
    L = w_stacked.shape[0]

    # Lane-dense feature dim (multiple of 128) and sublane-aligned batch tile.
    Dp = _round_up(max(D, 128), 128)
    if tm is None:
        tm = min(256, _round_up(B, 8))        # >= 8 sublane rows, cap at 256
    Bp = _round_up(B, tm)

    # Zero-pad (exact: padded lanes stay zero through the whole chain).
    x_p = jnp.pad(x, ((0, Bp - B), (0, Dp - D)))
    w_p = jnp.pad(w_stacked.astype(compute_dtype),
                  ((0, 0), (0, Dp - D), (0, Dp - D)))
    b_p = jnp.pad(b_stacked.astype(jnp.float32),
                  ((0, 0), (0, 0), (0, Dp - D)))

    # VMEM budget: resident weights + biases + double-buffered x/out tiles.
    w_bytes = L * Dp * Dp * jnp.dtype(compute_dtype).itemsize
    b_bytes = L * Dp * 4
    io_bytes = 2 * 2 * tm * Dp * x.dtype.itemsize
    vmem_limit = int(min(128 << 20,
                         max(32 << 20, w_bytes + b_bytes + io_bytes + (16 << 20))))
    # TODO(synk): for D >= ~1024 (v7x 64 MiB VMEM), stream weights per layer via a
    # trailing "arbitrary" L grid axis + resident accumulator instead of mapping
    # the whole (L, Dp, Dp) stack into VMEM.

    out = pl.pallas_call(
        functools.partial(mlp_chain_kernel, compute_dtype=compute_dtype),
        out_shape=jax.ShapeDtypeStruct((Bp, Dp), x.dtype),
        grid=(Bp // tm,),
        in_specs=[
            pl.BlockSpec((tm, Dp), lambda i: (i, 0)),        # batch tile
            pl.BlockSpec((L, Dp, Dp), lambda i: (0, 0, 0)),  # weights, grid-resident
            pl.BlockSpec((L, 1, Dp), lambda i: (0, 0, 0)),   # biases, grid-resident
        ],
        out_specs=pl.BlockSpec((tm, Dp), lambda i: (i, 0)),
        compiler_params=pltpu.CompilerParams(
            dimension_semantics=("parallel",),
            vmem_limit_bytes=vmem_limit,
        ),
    )(x_p, w_p, b_p)

    return out[:B, :D]


def init_params(key, num_layers, size):
    """Deterministic init mimicking torch.nn.Linear defaults (uniform +/- 1/sqrt(fan_in))."""
    bound = 1.0 / jnp.sqrt(jnp.float32(size))
    kw, kb = jax.random.split(key)
    # Weights stored pre-transposed: (L, in, out) == (L, D, D).
    w = jax.random.uniform(kw, (num_layers, size, size), jnp.float32, -bound, bound)
    b = jax.random.uniform(kb, (num_layers, 1, size), jnp.float32, -bound, bound)
    return w, b


if __name__ == "__main__":
    SIZE = 32          # feature dim of each Linear(size, size)
    BATCH = 8
    NUM_LAYERS = 10

    key = jax.random.PRNGKey(0)
    kx, kp = jax.random.split(key)
    x = jax.random.normal(kx, (BATCH, SIZE), jnp.float32)
    w_stacked, b_stacked = init_params(kp, NUM_LAYERS, SIZE)

    # f32 compute for a tight correctness check; use compute_dtype=jnp.bfloat16
    # for production shapes on v6e/v7x.
    out = some_module_forward(x, w_stacked, b_stacked, compute_dtype=jnp.float32)
    out = jax.block_until_ready(out)

    # Pure-JAX reference check.
    ref = x
    for l in range(NUM_LAYERS):
        ref = ref @ w_stacked[l] + b_stacked[l]
    assert out.shape == (BATCH, SIZE)
    assert jnp.allclose(out, ref, atol=1e-4, rtol=1e-4)

    print("KERNEL_OK")
</pallas_src>

<mosaic_0001>
module attributes {stable_mosaic.version = 11 : i64} {
  func.func @mlp_chain_kernel(%arg0: i32, %arg1: memref<8x128xf32, #tpu.memory_space<vmem>>, %arg2: memref<10x128x128xf32, #tpu.memory_space<vmem>>, %arg3: memref<10x1x128xf32, #tpu.memory_space<vmem>>, %arg4: memref<8x128xf32, #tpu.memory_space<vmem>>) attributes {dimension_semantics = [#tpu.dimension_semantics<parallel>], iteration_bounds = array<i64: 1>, scalar_prefetch = 0 : i64, scratch_operands = 0 : i64, tpu.core_type = #tpu.core_type<tc>, window_params = [{transform_indices = @transform_0, window_bounds = array<i64: 8, 128>}, {pipeline_mode = #tpu.pipeline_mode<synchronous>, transform_indices = @transform_1, window_bounds = array<i64: 10, 128, 128>}, {pipeline_mode = #tpu.pipeline_mode<synchronous>, transform_indices = @transform_2, window_bounds = array<i64: 10, 1, 128>}, {transform_indices = @transform_3, window_bounds = array<i64: 8, 128>}]} {
    %c0 = arith.constant 0 : index
    %c0_0 = arith.constant 0 : index
    %0 = vector.load %arg1[%c0, %c0_0] : memref<8x128xf32, #tpu.memory_space<vmem>>, vector<8x128xf32>
    %c0_i32 = arith.constant 0 : i32
    %1 = arith.index_cast %c0_i32 : i32 to index
    %c0_1 = arith.constant 0 : index
    %c0_2 = arith.constant 0 : index
    %2 = vector.load %arg2[%1, %c0_1, %c0_2] : memref<10x128x128xf32, #tpu.memory_space<vmem>>, vector<1x128x128xf32>
    %3 = vector.shape_cast %2 : vector<1x128x128xf32> to vector<128x128xf32>
    %cst = arith.constant dense<0.000000e+00> : vector<8x128xf32>
    %4 = tpu.matmul %0, %3, %cst {dimension_numbers = #tpu.dot_dimension_numbers<[1], [0], [0], [1], [0, 0, 1, 1], [], []>} : vector<8x128xf32>, vector<128x128xf32>, vector<8x128xf32> -> vector<8x128xf32>
    %5 = arith.index_cast %c0_i32 : i32 to index
    %c0_3 = arith.constant 0 : index
    %c0_4 = arith.constant 0 : index
    %6 = vector.load %arg3[%5, %c0_3, %c0_4] : memref<10x1x128xf32, #tpu.memory_space<vmem>>, vector<1x1x128xf32>
    %7 = vector.shape_cast %6 : vector<1x1x128xf32> to vector<1x128xf32>
    %8 = vector.broadcast %7 : vector<1x128xf32> to vector<8x128xf32>
    %9 = arith.addf %4, %8 : vector<8x128xf32>
    %c1_i32 = arith.constant 1 : i32
    %10 = arith.index_cast %c1_i32 : i32 to index
    %c0_5 = arith.constant 0 : index
    %c0_6 = arith.constant 0 : index
    %11 = vector.load %arg2[%10, %c0_5, %c0_6] : memref<10x128x128xf32, #tpu.memory_space<vmem>>, vector<1x128x128xf32>
    %12 = vector.shape_cast %11 : vector<1x128x128xf32> to vector<128x128xf32>
    %cst_7 = arith.constant dense<0.000000e+00> : vector<8x128xf32>
    %13 = tpu.matmul %9, %12, %cst_7 {dimension_numbers = #tpu.dot_dimension_numbers<[1], [0], [0], [1], [0, 0, 1, 1], [], []>} : vector<8x128xf32>, vector<128x128xf32>, vector<8x128xf32> -> vector<8x128xf32>
    %14 = arith.index_cast %c1_i32 : i32 to index
    %c0_8 = arith.constant 0 : index
    %c0_9 = arith.constant 0 : index
    %15 = vector.load %arg3[%14, %c0_8, %c0_9] : memref<10x1x128xf32, #tpu.memory_space<vmem>>, vector<1x1x128xf32>
    %16 = vector.shape_cast %15 : vector<1x1x128xf32> to vector<1x128xf32>
    %17 = vector.broadcast %16 : vector<1x128xf32> to vector<8x128xf32>
    %18 = arith.addf %13, %17 : vector<8x128xf32>
    %c2_i32 = arith.constant 2 : i32
    %19 = arith.index_cast %c2_i32 : i32 to index
    %c0_10 = arith.constant 0 : index
    %c0_11 = arith.constant 0 : index
    %20 = vector.load %arg2[%19, %c0_10, %c0_11] : memref<10x128x128xf32, #tpu.memory_space<vmem>>, vector<1x128x128xf32>
    %21 = vector.shape_cast %20 : vector<1x128x128xf32> to vector<128x128xf32>
    %cst_12 = arith.constant dense<0.000000e+00> : vector<8x128xf32>
    %22 = tpu.matmul %18, %21, %cst_12 {dimension_numbers = #tpu.dot_dimension_numbers<[1], [0], [0], [1], [0, 0, 1, 1], [], []>} : vector<8x128xf32>, vector<128x128xf32>, vector<8x128xf32> -> vector<8x128xf32>
    %23 = arith.index_cast %c2_i32 : i32 to index
    %c0_13 = arith.constant 0 : index
    %c0_14 = arith.constant 0 : index
    %24 = vector.load %arg3[%23, %c0_13, %c0_14] : memref<10x1x128xf32, #tpu.memory_space<vmem>>, vector<1x1x128xf32>
    %25 = vector.shape_cast %24 : vector<1x1x128xf32> to vector<1x128xf32>
    %26 = vector.broadcast %25 : vector<1x128xf32> to vector<8x128xf32>
    %27 = arith.addf %22, %26 : vector<8x128xf32>
    %c3_i32 = arith.constant 3 : i32
    %28 = arith.index_cast %c3_i32 : i32 to index
    %c0_15 = arith.constant 0 : index
    %c0_16 = arith.constant 0 : index
    %29 = vector.load %arg2[%28, %c0_15, %c0_16] : memref<10x128x128xf32, #tpu.memory_space<vmem>>, vector<1x128x128xf32>
    %30 = vector.shape_cast %29 : vector<1x128x128xf32> to vector<128x128xf32>
    %cst_17 = arith.constant dense<0.000000e+00> : vector<8x128xf32>
    %31 = tpu.matmul %27, %30, %cst_17 {dimension_numbers = #tpu.dot_dimension_numbers<[1], [0], [0], [1], [0, 0, 1, 1], [], []>} : vector<8x128xf32>, vector<128x128xf32>, vector<8x128xf32> -> vector<8x128xf32>
    %32 = arith.index_cast %c3_i32 : i32 to index
    %c0_18 = arith.constant 0 : index
    %c0_19 = arith.constant 0 : index
    %33 = vector.load %arg3[%32, %c0_18, %c0_19] : memref<10x1x128xf32, #tpu.memory_space<vmem>>, vector<1x1x128xf32>
    %34 = vector.shape_cast %33 : vector<1x1x128xf32> to vector<1x128xf32>
    %35 = vector.broadcast %34 : vector<1x128xf32> to vector<8x128xf32>
    %36 = arith.addf %31, %35 : vector<8x128xf32>
    %c4_i32 = arith.constant 4 : i32
    %37 = arith.index_cast %c4_i32 : i32 to index
    %c0_20 = arith.constant 0 : index
    %c0_21 = arith.constant 0 : index
    %38 = vector.load %arg2[%37, %c0_20, %c0_21] : memref<10x128x128xf32, #tpu.memory_space<vmem>>, vector<1x128x128xf32>
    %39 = vector.shape_cast %38 : vector<1x128x128xf32> to vector<128x128xf32>
    %cst_22 = arith.constant dense<0.000000e+00> : vector<8x128xf32>
    %40 = tpu.matmul %36, %39, %cst_22 {dimension_numbers = #tpu.dot_dimension_numbers<[1], [0], [0], [1], [0, 0, 1, 1], [], []>} : vector<8x128xf32>, vector<128x128xf32>, vector<8x128xf32> -> vector<8x128xf32>
    %41 = arith.index_cast %c4_i32 : i32 to index
    %c0_23 = arith.constant 0 : index
    %c0_24 = arith.constant 0 : index
    %42 = vector.load %arg3[%41, %c0_23, %c0_24] : memref<10x1x128xf32, #tpu.memory_space<vmem>>, vector<1x1x128xf32>
    %43 = vector.shape_cast %42 : vector<1x1x128xf32> to vector<1x128xf32>
    %44 = vector.broadcast %43 : vector<1x128xf32> to vector<8x128xf32>
    %45 = arith.addf %40, %44 : vector<8x128xf32>
    %c5_i32 = arith.constant 5 : i32
    %46 = arith.index_cast %c5_i32 : i32 to index
    %c0_25 = arith.constant 0 : index
    %c0_26 = arith.constant 0 : index
    %47 = vector.load %arg2[%46, %c0_25, %c0_26] : memref<10x128x128xf32, #tpu.memory_space<vmem>>, vector<1x128x128xf32>
    %48 = vector.shape_cast %47 : vector<1x128x128xf32> to vector<128x128xf32>
    %cst_27 = arith.constant dense<0.000000e+00> : vector<8x128xf32>
    %49 = tpu.matmul %45, %48, %cst_27 {dimension_numbers = #tpu.dot_dimension_numbers<[1], [0], [0], [1], [0, 0, 1, 1], [], []>} : vector<8x128xf32>, vector<128x128xf32>, vector<8x128xf32> -> vector<8x128xf32>
    %50 = arith.index_cast %c5_i32 : i32 to index
    %c0_28 = arith.constant 0 : index
    %c0_29 = arith.constant 0 : index
    %51 = vector.load %arg3[%50, %c0_28, %c0_29] : memref<10x1x128xf32, #tpu.memory_space<vmem>>, vector<1x1x128xf32>
    %52 = vector.shape_cast %51 : vector<1x1x128xf32> to vector<1x128xf32>
    %53 = vector.broadcast %52 : vector<1x128xf32> to vector<8x128xf32>
    %54 = arith.addf %49, %53 : vector<8x128xf32>
    %c6_i32 = arith.constant 6 : i32
    %55 = arith.index_cast %c6_i32 : i32 to index
    %c0_30 = arith.constant 0 : index
    %c0_31 = arith.constant 0 : index
    %56 = vector.load %arg2[%55, %c0_30, %c0_31] : memref<10x128x128xf32, #tpu.memory_space<vmem>>, vector<1x128x128xf32>
    %57 = vector.shape_cast %56 : vector<1x128x128xf32> to vector<128x128xf32>
    %cst_32 = arith.constant dense<0.000000e+00> : vector<8x128xf32>
    %58 = tpu.matmul %54, %57, %cst_32 {dimension_numbers = #tpu.dot_dimension_numbers<[1], [0], [0], [1], [0, 0, 1, 1], [], []>} : vector<8x128xf32>, vector<128x128xf32>, vector<8x128xf32> -> vector<8x128xf32>
    %59 = arith.index_cast %c6_i32 : i32 to index
    %c0_33 = arith.constant 0 : index
    %c0_34 = arith.constant 0 : index
    %60 = vector.load %arg3[%59, %c0_33, %c0_34] : memref<10x1x128xf32, #tpu.memory_space<vmem>>, vector<1x1x128xf32>
    %61 = vector.shape_cast %60 : vector<1x1x128xf32> to vector<1x128xf32>
    %62 = vector.broadcast %61 : vector<1x128xf32> to vector<8x128xf32>
    %63 = arith.addf %58, %62 : vector<8x128xf32>
    %c7_i32 = arith.constant 7 : i32
    %64 = arith.index_cast %c7_i32 : i32 to index
    %c0_35 = arith.constant 0 : index
    %c0_36 = arith.constant 0 : index
    %65 = vector.load %arg2[%64, %c0_35, %c0_36] : memref<10x128x128xf32, #tpu.memory_space<vmem>>, vector<1x128x128xf32>
    %66 = vector.shape_cast %65 : vector<1x128x128xf32> to vector<128x128xf32>
    %cst_37 = arith.constant dense<0.000000e+00> : vector<8x128xf32>
    %67 = tpu.matmul %63, %66, %cst_37 {dimension_numbers = #tpu.dot_dimension_numbers<[1], [0], [0], [1], [0, 0, 1, 1], [], []>} : vector<8x128xf32>, vector<128x128xf32>, vector<8x128xf32> -> vector<8x128xf32>
    %68 = arith.index_cast %c7_i32 : i32 to index
    %c0_38 = arith.constant 0 : index
    %c0_39 = arith.constant 0 : index
    %69 = vector.load %arg3[%68, %c0_38, %c0_39] : memref<10x1x128xf32, #tpu.memory_space<vmem>>, vector<1x1x128xf32>
    %70 = vector.shape_cast %69 : vector<1x1x128xf32> to vector<1x128xf32>
    %71 = vector.broadcast %70 : vector<1x128xf32> to vector<8x128xf32>
    %72 = arith.addf %67, %71 : vector<8x128xf32>
    %c8_i32 = arith.constant 8 : i32
    %73 = arith.index_cast %c8_i32 : i32 to index
    %c0_40 = arith.constant 0 : index
    %c0_41 = arith.constant 0 : index
    %74 = vector.load %arg2[%73, %c0_40, %c0_41] : memref<10x128x128xf32, #tpu.memory_space<vmem>>, vector<1x128x128xf32>
    %75 = vector.shape_cast %74 : vector<1x128x128xf32> to vector<128x128xf32>
    %cst_42 = arith.constant dense<0.000000e+00> : vector<8x128xf32>
    %76 = tpu.matmul %72, %75, %cst_42 {dimension_numbers = #tpu.dot_dimension_numbers<[1], [0], [0], [1], [0, 0, 1, 1], [], []>} : vector<8x128xf32>, vector<128x128xf32>, vector<8x128xf32> -> vector<8x128xf32>
    %77 = arith.index_cast %c8_i32 : i32 to index
    %c0_43 = arith.constant 0 : index
    %c0_44 = arith.constant 0 : index
    %78 = vector.load %arg3[%77, %c0_43, %c0_44] : memref<10x1x128xf32, #tpu.memory_space<vmem>>, vector<1x1x128xf32>
    %79 = vector.shape_cast %78 : vector<1x1x128xf32> to vector<1x128xf32>
    %80 = vector.broadcast %79 : vector<1x128xf32> to vector<8x128xf32>
    %81 = arith.addf %76, %80 : vector<8x128xf32>
    %c9_i32 = arith.constant 9 : i32
    %82 = arith.index_cast %c9_i32 : i32 to index
    %c0_45 = arith.constant 0 : index
    %c0_46 = arith.constant 0 : index
    %83 = vector.load %arg2[%82, %c0_45, %c0_46] : memref<10x128x128xf32, #tpu.memory_space<vmem>>, vector<1x128x128xf32>
    %84 = vector.shape_cast %83 : vector<1x128x128xf32> to vector<128x128xf32>
    %cst_47 = arith.constant dense<0.000000e+00> : vector<8x128xf32>
    %85 = tpu.matmul %81, %84, %cst_47 {dimension_numbers = #tpu.dot_dimension_numbers<[1], [0], [0], [1], [0, 0, 1, 1], [], []>} : vector<8x128xf32>, vector<128x128xf32>, vector<8x128xf32> -> vector<8x128xf32>
    %86 = arith.index_cast %c9_i32 : i32 to index
    %c0_48 = arith.constant 0 : index
    %c0_49 = arith.constant 0 : index
    %87 = vector.load %arg3[%86, %c0_48, %c0_49] : memref<10x1x128xf32, #tpu.memory_space<vmem>>, vector<1x1x128xf32>
    %88 = vector.shape_cast %87 : vector<1x1x128xf32> to vector<1x128xf32>
    %89 = vector.broadcast %88 : vector<1x128xf32> to vector<8x128xf32>
    %90 = arith.addf %85, %89 : vector<8x128xf32>
    %c10_i32 = arith.constant 10 : i32
    %c0_50 = arith.constant 0 : index
    %c0_51 = arith.constant 0 : index
    %91 = vector.load %arg4[%c0_50, %c0_51] : memref<8x128xf32, #tpu.memory_space<vmem>>, vector<8x128xf32>
    tpu.vector_store %arg4[%c0_50, %c0_51], %90 {strides = array<i32>} : memref<8x128xf32, #tpu.memory_space<vmem>>, vector<8x128xf32>,
    return
  }
  func.func @transform_0(%arg0: i32) -> (i32, i32) {
    %c0_i32 = arith.constant 0 : i32
    %c0_i32_0 = arith.constant 0 : i32
    return %arg0, %c0_i32 : i32, i32
  }
  func.func @transform_1(%arg0: i32) -> (i32, i32, i32) {
    %c0_i32 = arith.constant 0 : i32
    %c0_i32_0 = arith.constant 0 : i32
    %c0_i32_1 = arith.constant 0 : i32
    %c0_i32_2 = arith.constant 0 : i32
    return %c0_i32, %c0_i32_0, %c0_i32_1 : i32, i32, i32
  }
  func.func @transform_2(%arg0: i32) -> (i32, i32, i32) {
    %c0_i32 = arith.constant 0 : i32
    %c0_i32_0 = arith.constant 0 : i32
    %c0_i32_1 = arith.constant 0 : i32
    %c0_i32_2 = arith.constant 0 : i32
    return %c0_i32, %c0_i32_0, %c0_i32_1 : i32, i32, i32
  }
  func.func @transform_3(%arg0: i32) -> (i32, i32) {
    %c0_i32 = arith.constant 0 : i32
    %c0_i32_0 = arith.constant 0 : i32
    return %arg0, %c0_i32 : i32, i32
  }
}

</mosaic_0001>

<llo_original>
// kernel: tpu_custom_call.1
$region0: #{tpu_custom_call.1}
  #allocation0 [shape = 'u32[]', space=smem, size = 0x4, offset = 0x4, fixed_abs, tag = 'smem constant byte address 0x4 - core index']
  #allocation1 [shape = 'u32[72,128]{1,0:T(1,128)}', space=vmem, size = 0x9000, scoped, tag = 'internal scratch']
  %s0 = inlined_call_operand.hbm [shape: f32[8,128], index: 0, kind: input, shape index: {}]
  %s1 = inlined_call_operand.hbm [shape: f32[10,128,128], index: 1, kind: input, shape index: {}]
  %s2 = inlined_call_operand.hbm [shape: f32[10,1,128], index: 2, kind: input, shape index: {}]
  %s3 = inlined_call_operand.hbm [shape: f32[8,128], index: 3, kind: output, shape index: {}]
  %s4 = sld [smem:[#allocation0]]
  $region34: #{tpu_custom_call.1} parent=0
    _
  %s6 = ssub.s32 1, %s4
  %s7 = scalar_select 0, %s6, %s4
  $region1: #{tpu_custom_call.1} parent=0
    #allocation2 [shape = 'u8[4096]{0}', space=vmem, size = 0x1000, scoped, tag = 'input window, operand 0, single buffered']
    #allocation3 [shape = 's32[1]{0}', space=sflag, size = 0x4, scoped, tag = 'scoped memory for tpu_custom_call.1']
    #allocation4 [shape = 's32[1]{0}', space=sflag, size = 0x4, scoped, tag = 'scoped memory for tpu_custom_call.1']
    #allocation5 [shape = 'u8[655360]{0}', space=vmem, size = 0xa0000, scoped, tag = 'input window, operand 1, single buffered']
    #allocation6 [shape = 's32[1]{0}', space=sflag, size = 0x4, scoped, tag = 'scoped memory for tpu_custom_call.1']
    #allocation7 [shape = 'u8[5120]{0}', space=vmem, size = 0x1400, scoped, tag = 'input window, operand 2, single buffered']
    #allocation8 [shape = 'u8[4096]{0}', space=vmem, size = 0x1000, scoped, tag = 'output window, operand 0, single buffered']
    %8 = vsyncpa [#allocation3], 0
    %9 = vsyncpa [#allocation6], 0
    %10 = vsyncpa [#allocation4], 0
    // Predicated region
    $region2: #{tpu_custom_call.1} parent=1 // pred_check
      _
    $region3: #{tpu_custom_call.1} parent=1 // pred_check_branch
      %12 = sbr.rel (0) target = $region5
    $region4: #{tpu_custom_call.1} parent=1 // pred_region
      %14 = vsyncadd [#allocation3], 0
      %s16 = sshll.u32 %s0, 4
      %s17 = int_to_ptr.hbm [resolvable:$true] %s16
      %s18 = sshll.u32 [#allocation2], 4
      %s19 = int_to_ptr.vmem [resolvable:$true] %s18
      %21 = dma.hbm_to_vmem [thread:$0]  %s17, 128, %s19, [#allocation3]
    $region5: #{tpu_custom_call.1} parent=1 // pred_fallthru
      _
    // Predicated region
    $region6: #{tpu_custom_call.1} parent=1 // pred_check
      _
    $region7: #{tpu_custom_call.1} parent=1 // pred_check_branch
      %23 = sbr.rel (0) target = $region9
    $region8: #{tpu_custom_call.1} parent=1 // pred_region
      %25 = vsyncadd [#allocation6], 0
      %s26 = sshll.u32 %s1, 4
      %s27 = int_to_ptr.hbm [resolvable:$true] %s26
      %s28 = sshll.u32 [#allocation5], 4
      %s29 = int_to_ptr.vmem [resolvable:$true] %s28
      %34 = dma.hbm_to_vmem [thread:$0]  %s27, 20480, %s29, [#allocation6], 128, 128, 8
    $region9: #{tpu_custom_call.1} parent=1 // pred_fallthru
      _
    // Predicated region
    $region10: #{tpu_custom_call.1} parent=1 // pred_check
      _
    $region11: #{tpu_custom_call.1} parent=1 // pred_check_branch
      %36 = sbr.rel (0) target = $region13
    $region12: #{tpu_custom_call.1} parent=1 // pred_region
      %38 = vsyncadd [#allocation6], 0
      %s39 = sshll.u32 %s2, 4
      %s40 = int_to_ptr.hbm [resolvable:$true] %s39
      %s41 = sshll.u32 [#allocation7], 4
      %s42 = int_to_ptr.vmem [resolvable:$true] %s41
      %47 = dma.hbm_to_vmem [thread:$0]  %s40, 160, %s42, [#allocation6], 16, 16, 1
    $region13: #{tpu_custom_call.1} parent=1 // pred_fallthru
      _
    // Predicated region
    $region14: #{tpu_custom_call.1} parent=1 // pred_check
      _
    $region15: #{tpu_custom_call.1} parent=1 // pred_check_branch
      %49 = sbr.rel (0) target = $region17
    $region16: #{tpu_custom_call.1} parent=1 // pred_region
      %51 = dma.done [#allocation3], 128
    $region17: #{tpu_custom_call.1} parent=1 // pred_fallthru
      _
    // Predicated region
    $region18: #{tpu_custom_call.1} parent=1 // pred_check
      _
    $region19: #{tpu_custom_call.1} parent=1 // pred_check_branch
      %53 = sbr.rel (0) target = $region21
    $region20: #{tpu_custom_call.1} parent=1 // pred_region
      %55 = dma.done [#allocation6], 20480
    $region21: #{tpu_custom_call.1} parent=1 // pred_fallthru
      _
    // Predicated region
    $region22: #{tpu_custom_call.1} parent=1 // pred_check
      _
    $region23: #{tpu_custom_call.1} parent=1 // pred_check_branch
      %57 = sbr.rel (0) target = $region25
    $region24: #{tpu_custom_call.1} parent=1 // pred_region
      %59 = dma.done [#allocation6], 160
    $region25: #{tpu_custom_call.1} parent=1 // pred_fallthru
      _
    %v60 = vld [vmem:[#allocation2] sm:$0xff]
    %v61 = vld [vmem:[#allocation5] sm:$0xff]
    %v62 = vld [vmem:[#allocation5 + $0x8] sm:$0xff]
    %v63 = vld [vmem:[#allocation5 + $0x10] sm:$0xff]
    %v64 = vld [vmem:[#allocation5 + $0x18] sm:$0xff]
    %v65 = vld [vmem:[#allocation5 + $0x20] sm:$0xff]
    %v66 = vld [vmem:[#allocation5 + $0x28] sm:$0xff]
    %v67 = vld [vmem:[#allocation5 + $0x30] sm:$0xff]
    %v68 = vld [vmem:[#allocation5 + $0x38] sm:$0xff]
    %v69 = vld [vmem:[#allocation5 + $0x40] sm:$0xff]
    %v70 = vld [vmem:[#allocation5 + $0x48] sm:$0xff]
    %v71 = vld [vmem:[#allocation5 + $0x50] sm:$0xff]
    %v72 = vld [vmem:[#allocation5 + $0x58] sm:$0xff]
    %v73 = vld [vmem:[#allocation5 + $0x60] sm:$0xff]
    %v74 = vld [vmem:[#allocation5 + $0x68] sm:$0xff]
    %v75 = vld [vmem:[#allocation5 + $0x70] sm:$0xff]
    %v76 = vld [vmem:[#allocation5 + $0x78] sm:$0xff]
    %v77 = vld [vmem:[#allocation7] sm:$0x1]
    %v79 = vperm.slane %v77, 0
    %81 = vmatpush.msra.mxu0 %v76
    %82 = vmatpush.msra.mxu0 %v75
    %83 = vmatpush.msra.mxu0 %v74
    %84 = vmatpush.msra.mxu0 %v73
    %85 = vmatpush.msra.mxu0 %v72
    %86 = vmatpush.msra.mxu0 %v71
    %87 = vmatpush.msra.mxu0 %v70
    %88 = vmatpush.msra.mxu0 %v69
    %89 = vmatpush.msra.mxu0 %v68
    %90 = vmatpush.msra.mxu0 %v67
    %91 = vmatpush.msra.mxu0 %v66
    %92 = vmatpush.msra.mxu0 %v65
    %93 = vmatpush.msra.mxu0 %v64
    %94 = vmatpush.msra.mxu0 %v63
    %95 = vmatpush.msra.mxu0 %v62
    %96 = vmatpush.msra.mxu0 %v61
    %97 = vmatmul.f32.gmra.mxu0 %v60
    %v98 = vpop.f32.mrf.mxu0
    %v99 = vadd.f32 %v79, %v98
    %100 = vdwg.mxu0
    %s101 = scalar_lea.vmem [#allocation5], 128
    %v102 = vld [vmem:[%s101] sm:$0xff]
    %v103 = vld [vmem:[%s101 + $0x8] sm:$0xff]
    %v104 = vld [vmem:[%s101 + $0x10] sm:$0xff]
    %v105 = vld [vmem:[%s101 + $0x18] sm:$0xff]
    %v106 = vld [vmem:[%s101 + $0x20] sm:$0xff]
    %v107 = vld [vmem:[%s101 + $0x28] sm:$0xff]
    %v108 = vld [vmem:[%s101 + $0x30] sm:$0xff]
    %v109 = vld [vmem:[%s101 + $0x38] sm:$0xff]
    %v110 = vld [vmem:[%s101 + $0x40] sm:$0xff]
    %v111 = vld [vmem:[%s101 + $0x48] sm:$0xff]
    %v112 = vld [vmem:[%s101 + $0x50] sm:$0xff]
    %v113 = vld [vmem:[%s101 + $0x58] sm:$0xff]
    %v114 = vld [vmem:[%s101 + $0x60] sm:$0xff]
    %v115 = vld [vmem:[%s101 + $0x68] sm:$0xff]
    %v116 = vld [vmem:[%s101 + $0x70] sm:$0xff]
    %v117 = vld [vmem:[%s101 + $0x78] sm:$0xff]
    %s118 = scalar_lea.vmem [#allocation7], 1
    %v119 = vld [vmem:[%s118] sm:$0x1]
    %v121 = vperm.slane %v119, 0
    %123 = vmatpush.msra.mxu0 %v117
    %124 = vmatpush.msra.mxu0 %v116
    %125 = vmatpush.msra.mxu0 %v115
    %126 = vmatpush.msra.mxu0 %v114
    %127 = vmatpush.msra.mxu0 %v113
    %128 = vmatpush.msra.mxu0 %v112
    %129 = vmatpush.msra.mxu0 %v111
    %130 = vmatpush.msra.mxu0 %v110
    %131 = vmatpush.msra.mxu0 %v109
    %132 = vmatpush.msra.mxu0 %v108
    %133 = vmatpush.msra.mxu0 %v107
    %134 = vmatpush.msra.mxu0 %v106
    %135 = vmatpush.msra.mxu0 %v105
    %136 = vmatpush.msra.mxu0 %v104
    %137 = vmatpush.msra.mxu0 %v103
    %138 = vmatpush.msra.mxu0 %v102
    %139 = vmatmul.f32.gmra.mxu0 %v99
    %v140 = vpop.f32.mrf.mxu0
    %v141 = vadd.f32 %v121, %v140
    %142 = vdwg.mxu0
    %s143 = scalar_lea.vmem [#allocation5], 256
    %v144 = vld [vmem:[%s143] sm:$0xff]
    %v145 = vld [vmem:[%s143 + $0x8] sm:$0xff]
    %v146 = vld [vmem:[%s143 + $0x10] sm:$0xff]
    %v147 = vld [vmem:[%s143 + $0x18] sm:$0xff]
    %v148 = vld [vmem:[%s143 + $0x20] sm:$0xff]
    %v149 = vld [vmem:[%s143 + $0x28] sm:$0xff]
    %v150 = vld [vmem:[%s143 + $0x30] sm:$0xff]
    %v151 = vld [vmem:[%s143 + $0x38] sm:$0xff]
    %v152 = vld [vmem:[%s143 + $0x40] sm:$0xff]
    %v153 = vld [vmem:[%s143 + $0x48] sm:$0xff]
    %v154 = vld [vmem:[%s143 + $0x50] sm:$0xff]
    %v155 = vld [vmem:[%s143 + $0x58] sm:$0xff]
    %v156 = vld [vmem:[%s143 + $0x60] sm:$0xff]
    %v157 = vld [vmem:[%s143 + $0x68] sm:$0xff]
    %v158 = vld [vmem:[%s143 + $0x70] sm:$0xff]
    %v159 = vld [vmem:[%s143 + $0x78] sm:$0xff]
    %s160 = scalar_lea.vmem [#allocation7], 2
    %v161 = vld [vmem:[%s160] sm:$0x1]
    %v163 = vperm.slane %v161, 0
    %165 = vmatpush.msra.mxu0 %v159
    %166 = vmatpush.msra.mxu0 %v158
    %167 = vmatpush.msra.mxu0 %v157
    %168 = vmatpush.msra.mxu0 %v156
    %169 = vmatpush.msra.mxu0 %v155
    %170 = vmatpush.msra.mxu0 %v154
    %171 = vmatpush.msra.mxu0 %v153
    %172 = vmatpush.msra.mxu0 %v152
    %173 = vmatpush.msra.mxu0 %v151
    %174 = vmatpush.msra.mxu0 %v150
    %175 = vmatpush.msra.mxu0 %v149
    %176 = vmatpush.msra.mxu0 %v148
    %177 = vmatpush.msra.mxu0 %v147
    %178 = vmatpush.msra.mxu0 %v146
    %179 = vmatpush.msra.mxu0 %v145
    %180 = vmatpush.msra.mxu0 %v144
    %181 = vmatmul.f32.gmra.mxu0 %v141
    %v182 = vpop.f32.mrf.mxu0
    %v183 = vadd.f32 %v163, %v182
    %184 = vdwg.mxu0
    %s185 = scalar_lea.vmem [#allocation5], 384
    %v186 = vld [vmem:[%s185] sm:$0xff]
    %v187 = vld [vmem:[%s185 + $0x8] sm:$0xff]
    %v188 = vld [vmem:[%s185 + $0x10] sm:$0xff]
    %v189 = vld [vmem:[%s185 + $0x18] sm:$0xff]
    %v190 = vld [vmem:[%s185 + $0x20] sm:$0xff]
    %v191 = vld [vmem:[%s185 + $0x28] sm:$0xff]
    %v192 = vld [vmem:[%s185 + $0x30] sm:$0xff]
    %v193 = vld [vmem:[%s185 + $0x38] sm:$0xff]
    %v194 = vld [vmem:[%s185 + $0x40] sm:$0xff]
    %v195 = vld [vmem:[%s185 + $0x48] sm:$0xff]
    %v196 = vld [vmem:[%s185 + $0x50] sm:$0xff]
    %v197 = vld [vmem:[%s185 + $0x58] sm:$0xff]
    %v198 = vld [vmem:[%s185 + $0x60] sm:$0xff]
    %v199 = vld [vmem:[%s185 + $0x68] sm:$0xff]
    %v200 = vld [vmem:[%s185 + $0x70] sm:$0xff]
    %v201 = vld [vmem:[%s185 + $0x78] sm:$0xff]
    %s202 = scalar_lea.vmem [#allocation7], 3
    %v203 = vld [vmem:[%s202] sm:$0x1]
    %v205 = vperm.slane %v203, 0
    %207 = vmatpush.msra.mxu0 %v201
    %208 = vmatpush.msra.mxu0 %v200
    %209 = vmatpush.msra.mxu0 %v199
    %210 = vmatpush.msra.mxu0 %v198
    %211 = vmatpush.msra.mxu0 %v197
    %212 = vmatpush.msra.mxu0 %v196
    %213 = vmatpush.msra.mxu0 %v195
    %214 = vmatpush.msra.mxu0 %v194
    %215 = vmatpush.msra.mxu0 %v193
    %216 = vmatpush.msra.mxu0 %v192
    %217 = vmatpush.msra.mxu0 %v191
    %218 = vmatpush.msra.mxu0 %v190
    %219 = vmatpush.msra.mxu0 %v189
    %220 = vmatpush.msra.mxu0 %v188
    %221 = vmatpush.msra.mxu0 %v187
    %222 = vmatpush.msra.mxu0 %v186
    %223 = vmatmul.f32.gmra.mxu0 %v183
    %v224 = vpop.f32.mrf.mxu0
    %v225 = vadd.f32 %v205, %v224
    %226 = vdwg.mxu0
    %s227 = scalar_lea.vmem [#allocation5], 512
    %v228 = vld [vmem:[%s227] sm:$0xff]
    %v229 = vld [vmem:[%s227 + $0x8] sm:$0xff]
    %v230 = vld [vmem:[%s227 + $0x10] sm:$0xff]
    %v231 = vld [vmem:[%s227 + $0x18] sm:$0xff]
    %v232 = vld [vmem:[%s227 + $0x20] sm:$0xff]
    %v233 = vld [vmem:[%s227 + $0x28] sm:$0xff]
    %v234 = vld [vmem:[%s227 + $0x30] sm:$0xff]
    %v235 = vld [vmem:[%s227 + $0x38] sm:$0xff]
    %v236 = vld [vmem:[%s227 + $0x40] sm:$0xff]
    %v237 = vld [vmem:[%s227 + $0x48] sm:$0xff]
    %v238 = vld [vmem:[%s227 + $0x50] sm:$0xff]
    %v239 = vld [vmem:[%s227 + $0x58] sm:$0xff]
    %v240 = vld [vmem:[%s227 + $0x60] sm:$0xff]
    %v241 = vld [vmem:[%s227 + $0x68] sm:$0xff]
    %v242 = vld [vmem:[%s227 + $0x70] sm:$0xff]
    %v243 = vld [vmem:[%s227 + $0x78] sm:$0xff]
    %s244 = scalar_lea.vmem [#allocation7], 4
    %v245 = vld [vmem:[%s244] sm:$0x1]
    %v247 = vperm.slane %v245, 0
    %249 = vmatpush.msra.mxu0 %v243
    %250 = vmatpush.msra.mxu0 %v242
    %251 = vmatpush.msra.mxu0 %v241
    %252 = vmatpush.msra.mxu0 %v240
    %253 = vmatpush.msra.mxu0 %v239
    %254 = vmatpush.msra.mxu0 %v238
    %255 = vmatpush.msra.mxu0 %v237
    %256 = vmatpush.msra.mxu0 %v236
    %257 = vmatpush.msra.mxu0 %v235
    %258 = vmatpush.msra.mxu0 %v234
    %259 = vmatpush.msra.mxu0 %v233
    %260 = vmatpush.msra.mxu0 %v232
    %261 = vmatpush.msra.mxu0 %v231
    %262 = vmatpush.msra.mxu0 %v230
    %263 = vmatpush.msra.mxu0 %v229
    %264 = vmatpush.msra.mxu0 %v228
    %265 = vmatmul.f32.gmra.mxu0 %v225
    %v266 = vpop.f32.mrf.mxu0
    %v267 = vadd.f32 %v247, %v266
    %268 = vdwg.mxu0
    %s269 = scalar_lea.vmem [#allocation5], 640
    %v270 = vld [vmem:[%s269] sm:$0xff]
    %v271 = vld [vmem:[%s269 + $0x8] sm:$0xff]
    %v272 = vld [vmem:[%s269 + $0x10] sm:$0xff]
    %v273 = vld [vmem:[%s269 + $0x18] sm:$0xff]
    %v274 = vld [vmem:[%s269 + $0x20] sm:$0xff]
    %v275 = vld [vmem:[%s269 + $0x28] sm:$0xff]
    %v276 = vld [vmem:[%s269 + $0x30] sm:$0xff]
    %v277 = vld [vmem:[%s269 + $0x38] sm:$0xff]
    %v278 = vld [vmem:[%s269 + $0x40] sm:$0xff]
    %v279 = vld [vmem:[%s269 + $0x48] sm:$0xff]
    %v280 = vld [vmem:[%s269 + $0x50] sm:$0xff]
    %v281 = vld [vmem:[%s269 + $0x58] sm:$0xff]
    %v282 = vld [vmem:[%s269 + $0x60] sm:$0xff]
    %v283 = vld [vmem:[%s269 + $0x68] sm:$0xff]
    %v284 = vld [vmem:[%s269 + $0x70] sm:$0xff]
    %v285 = vld [vmem:[%s269 + $0x78] sm:$0xff]
    %s286 = scalar_lea.vmem [#allocation7], 5
    %v287 = vld [vmem:[%s286] sm:$0x1]
    %v289 = vperm.slane %v287, 0
    %291 = vmatpush.msra.mxu0 %v285
    %292 = vmatpush.msra.mxu0 %v284
    %293 = vmatpush.msra.mxu0 %v283
    %294 = vmatpush.msra.mxu0 %v282
    %295 = vmatpush.msra.mxu0 %v281
    %296 = vmatpush.msra.mxu0 %v280
    %297 = vmatpush.msra.mxu0 %v279
    %298 = vmatpush.msra.mxu0 %v278
    %299 = vmatpush.msra.mxu0 %v277
    %300 = vmatpush.msra.mxu0 %v276
    %301 = vmatpush.msra.mxu0 %v275
    %302 = vmatpush.msra.mxu0 %v274
    %303 = vmatpush.msra.mxu0 %v273
    %304 = vmatpush.msra.mxu0 %v272
    %305 = vmatpush.msra.mxu0 %v271
    %306 = vmatpush.msra.mxu0 %v270
    %307 = vmatmul.f32.gmra.mxu0 %v267
    %v308 = vpop.f32.mrf.mxu0
    %v309 = vadd.f32 %v289, %v308
    %310 = vdwg.mxu0
    %s311 = scalar_lea.vmem [#allocation5], 768
    %v312 = vld [vmem:[%s311] sm:$0xff]
    %v313 = vld [vmem:[%s311 + $0x8] sm:$0xff]
    %v314 = vld [vmem:[%s311 + $0x10] sm:$0xff]
    %v315 = vld [vmem:[%s311 + $0x18] sm:$0xff]
    %v316 = vld [vmem:[%s311 + $0x20] sm:$0xff]
    %v317 = vld [vmem:[%s311 + $0x28] sm:$0xff]
    %v318 = vld [vmem:[%s311 + $0x30] sm:$0xff]
    %v319 = vld [vmem:[%s311 + $0x38] sm:$0xff]
    %v320 = vld [vmem:[%s311 + $0x40] sm:$0xff]
    %v321 = vld [vmem:[%s311 + $0x48] sm:$0xff]
    %v322 = vld [vmem:[%s311 + $0x50] sm:$0xff]
    %v323 = vld [vmem:[%s311 + $0x58] sm:$0xff]
    %v324 = vld [vmem:[%s311 + $0x60] sm:$0xff]
    %v325 = vld [vmem:[%s311 + $0x68] sm:$0xff]
    %v326 = vld [vmem:[%s311 + $0x70] sm:$0xff]
    %v327 = vld [vmem:[%s311 + $0x78] sm:$0xff]
    %s328 = scalar_lea.vmem [#allocation7], 6
    %v329 = vld [vmem:[%s328] sm:$0x1]
    %v331 = vperm.slane %v329, 0
    %333 = vmatpush.msra.mxu0 %v327
    %334 = vmatpush.msra.mxu0 %v326
    %335 = vmatpush.msra.mxu0 %v325
    %336 = vmatpush.msra.mxu0 %v324
    %337 = vmatpush.msra.mxu0 %v323
    %338 = vmatpush.msra.mxu0 %v322
    %339 = vmatpush.msra.mxu0 %v321
    %340 = vmatpush.msra.mxu0 %v320
    %341 = vmatpush.msra.mxu0 %v319
    %342 = vmatpush.msra.mxu0 %v318
    %343 = vmatpush.msra.mxu0 %v317
    %344 = vmatpush.msra.mxu0 %v316
    %345 = vmatpush.msra.mxu0 %v315
    %346 = vmatpush.msra.mxu0 %v314
    %347 = vmatpush.msra.mxu0 %v313
    %348 = vmatpush.msra.mxu0 %v312
    %349 = vmatmul.f32.gmra.mxu0 %v309
    %v350 = vpop.f32.mrf.mxu0
    %v351 = vadd.f32 %v331, %v350
    %352 = vdwg.mxu0
    %s353 = scalar_lea.vmem [#allocation5], 896
    %v354 = vld [vmem:[%s353] sm:$0xff]
    %v355 = vld [vmem:[%s353 + $0x8] sm:$0xff]
    %v356 = vld [vmem:[%s353 + $0x10] sm:$0xff]
    %v357 = vld [vmem:[%s353 + $0x18] sm:$0xff]
    %v358 = vld [vmem:[%s353 + $0x20] sm:$0xff]
    %v359 = vld [vmem:[%s353 + $0x28] sm:$0xff]
    %v360 = vld [vmem:[%s353 + $0x30] sm:$0xff]
    %v361 = vld [vmem:[%s353 + $0x38] sm:$0xff]
    %v362 = vld [vmem:[%s353 + $0x40] sm:$0xff]
    %v363 = vld [vmem:[%s353 + $0x48] sm:$0xff]
    %v364 = vld [vmem:[%s353 + $0x50] sm:$0xff]
    %v365 = vld [vmem:[%s353 + $0x58] sm:$0xff]
    %v366 = vld [vmem:[%s353 + $0x60] sm:$0xff]
    %v367 = vld [vmem:[%s353 + $0x68] sm:$0xff]
    %v368 = vld [vmem:[%s353 + $0x70] sm:$0xff]
    %v369 = vld [vmem:[%s353 + $0x78] sm:$0xff]
    %s370 = scalar_lea.vmem [#allocation7], 7
    %v371 = vld [vmem:[%s370] sm:$0x1]
    %v373 = vperm.slane %v371, 0
    %375 = vmatpush.msra.mxu0 %v369
    %376 = vmatpush.msra.mxu0 %v368
    %377 = vmatpush.msra.mxu0 %v367
    %378 = vmatpush.msra.mxu0 %v366
    %379 = vmatpush.msra.mxu0 %v365
    %380 = vmatpush.msra.mxu0 %v364
    %381 = vmatpush.msra.mxu0 %v363
    %382 = vmatpush.msra.mxu0 %v362
    %383 = vmatpush.msra.mxu0 %v361
    %384 = vmatpush.msra.mxu0 %v360
    %385 = vmatpush.msra.mxu0 %v359
    %386 = vmatpush.msra.mxu0 %v358
    %387 = vmatpush.msra.mxu0 %v357
    %388 = vmatpush.msra.mxu0 %v356
    %389 = vmatpush.msra.mxu0 %v355
    %390 = vmatpush.msra.mxu0 %v354
    %391 = vmatmul.f32.gmra.mxu0 %v351
    %v392 = vpop.f32.mrf.mxu0
    %v393 = vadd.f32 %v373, %v392
    %394 = vdwg.mxu0
    %s395 = scalar_lea.vmem [#allocation5], 1024
    %v396 = vld [vmem:[%s395] sm:$0xff]
    %v397 = vld [vmem:[%s395 + $0x8] sm:$0xff]
    %v398 = vld [vmem:[%s395 + $0x10] sm:$0xff]
    %v399 = vld [vmem:[%s395 + $0x18] sm:$0xff]
    %v400 = vld [vmem:[%s395 + $0x20] sm:$0xff]
    %v401 = vld [vmem:[%s395 + $0x28] sm:$0xff]
    %v402 = vld [vmem:[%s395 + $0x30] sm:$0xff]
    %v403 = vld [vmem:[%s395 + $0x38] sm:$0xff]
    %v404 = vld [vmem:[%s395 + $0x40] sm:$0xff]
    %v405 = vld [vmem:[%s395 + $0x48] sm:$0xff]
    %v406 = vld [vmem:[%s395 + $0x50] sm:$0xff]
    %v407 = vld [vmem:[%s395 + $0x58] sm:$0xff]
    %v408 = vld [vmem:[%s395 + $0x60] sm:$0xff]
    %v409 = vld [vmem:[%s395 + $0x68] sm:$0xff]
    %v410 = vld [vmem:[%s395 + $0x70] sm:$0xff]
    %v411 = vld [vmem:[%s395 + $0x78] sm:$0xff]
    %s412 = scalar_lea.vmem [#allocation7], 8
    %v413 = vld [vmem:[%s412] sm:$0x1]
    %v415 = vperm.slane %v413, 0
    %417 = vmatpush.msra.mxu0 %v411
    %418 = vmatpush.msra.mxu0 %v410
    %419 = vmatpush.msra.mxu0 %v409
    %420 = vmatpush.msra.mxu0 %v408
    %421 = vmatpush.msra.mxu0 %v407
    %422 = vmatpush.msra.mxu0 %v406
    %423 = vmatpush.msra.mxu0 %v405
    %424 = vmatpush.msra.mxu0 %v404
    %425 = vmatpush.msra.mxu0 %v403
    %426 = vmatpush.msra.mxu0 %v402
    %427 = vmatpush.msra.mxu0 %v401
    %428 = vmatpush.msra.mxu0 %v400
    %429 = vmatpush.msra.mxu0 %v399
    %430 = vmatpush.msra.mxu0 %v398
    %431 = vmatpush.msra.mxu0 %v397
    %432 = vmatpush.msra.mxu0 %v396
    %433 = vmatmul.f32.gmra.mxu0 %v393
    %v434 = vpop.f32.mrf.mxu0
    %v435 = vadd.f32 %v415, %v434
    %436 = vdwg.mxu0
    %s437 = scalar_lea.vmem [#allocation5], 1152
    %v438 = vld [vmem:[%s437] sm:$0xff]
    %v439 = vld [vmem:[%s437 + $0x8] sm:$0xff]
    %v440 = vld [vmem:[%s437 + $0x10] sm:$0xff]
    %v441 = vld [vmem:[%s437 + $0x18] sm:$0xff]
    %v442 = vld [vmem:[%s437 + $0x20] sm:$0xff]
    %v443 = vld [vmem:[%s437 + $0x28] sm:$0xff]
    %v444 = vld [vmem:[%s437 + $0x30] sm:$0xff]
    %v445 = vld [vmem:[%s437 + $0x38] sm:$0xff]
    %v446 = vld [vmem:[%s437 + $0x40] sm:$0xff]
    %v447 = vld [vmem:[%s437 + $0x48] sm:$0xff]
    %v448 = vld [vmem:[%s437 + $0x50] sm:$0xff]
    %v449 = vld [vmem:[%s437 + $0x58] sm:$0xff]
    %v450 = vld [vmem:[%s437 + $0x60] sm:$0xff]
    %v451 = vld [vmem:[%s437 + $0x68] sm:$0xff]
    %v452 = vld [vmem:[%s437 + $0x70] sm:$0xff]
    %v453 = vld [vmem:[%s437 + $0x78] sm:$0xff]
    %s454 = scalar_lea.vmem [#allocation7], 9
    %v455 = vld [vmem:[%s454] sm:$0x1]
    %v457 = vperm.slane %v455, 0
    %459 = vmatpush.msra.mxu0 %v453
    %460 = vmatpush.msra.mxu0 %v452
    %461 = vmatpush.msra.mxu0 %v451
    %462 = vmatpush.msra.mxu0 %v450
    %463 = vmatpush.msra.mxu0 %v449
    %464 = vmatpush.msra.mxu0 %v448
    %465 = vmatpush.msra.mxu0 %v447
    %466 = vmatpush.msra.mxu0 %v446
    %467 = vmatpush.msra.mxu0 %v445
    %468 = vmatpush.msra.mxu0 %v444
    %469 = vmatpush.msra.mxu0 %v443
    %470 = vmatpush.msra.mxu0 %v442
    %471 = vmatpush.msra.mxu0 %v441
    %472 = vmatpush.msra.mxu0 %v440
    %473 = vmatpush.msra.mxu0 %v439
    %474 = vmatpush.msra.mxu0 %v438
    %475 = vmatmul.f32.gmra.mxu0 %v435
    %v476 = vpop.f32.mrf.mxu0
    %v477 = vadd.f32 %v457, %v476
    %478 = vdwg.mxu0
    %479 = vst [vmem:[#allocation8] sm:$0xff] %v477
    // Predicated region
    $region26: #{tpu_custom_call.1} parent=1 // pred_check
      _
    $region27: #{tpu_custom_call.1} parent=1 // pred_check_branch
      %481 = sbr.rel (0) target = $region29
    $region28: #{tpu_custom_call.1} parent=1 // pred_region
      %483 = vsyncadd [#allocation4], 0
      %s485 = sshll.u32 [#allocation8], 4
      %s486 = int_to_ptr.vmem [resolvable:$true] %s485
      %s487 = sshll.u32 %s3, 4
      %s488 = int_to_ptr.hbm [resolvable:$true] %s487
      %490 = dma.vmem_to_hbm [thread:$0]  %s486, 128, %s488, [#allocation4]
    $region29: #{tpu_custom_call.1} parent=1 // pred_fallthru
      _
    // Predicated region
    $region30: #{tpu_custom_call.1} parent=1 // pred_check
      _
    $region31: #{tpu_custom_call.1} parent=1 // pred_check_branch
      %492 = sbr.rel (0) target = $region33
    $region32: #{tpu_custom_call.1} parent=1 // pred_region
      %494 = dma.done [#allocation4], 128
    $region33: #{tpu_custom_call.1} parent=1 // pred_fallthru
      _
    %495 = vsyncpa [#allocation3], 1
    %496 = vsyncpa [#allocation6], 1
    %497 = vsyncpa [#allocation4], 1

</llo_original>
